<compile_context>
chip_gen: v7x
topology: tpu7x:2x2x1
jax: 0.10.0
libtpu: 0.0.40
codegen_flags: <defaults>
</compile_context>

<pallas_src>
import functools
import inspect

import jax
import jax.numpy as jnp
from jax.experimental import pallas as pl
from jax.experimental.pallas import tpu as pltpu


def _round_up(x, m):
    return (x + m - 1) // m * m


def _cdiv(a, b):
    return -(-a // b)


def _vmem_capacity_bytes():
    """Physical per-core VMEM; conservative 64 MiB (v7x) if unqueryable."""
    try:
        return int(pltpu.get_tpu_info().vmem_capacity_bytes)
    except Exception:
        return 64 << 20


def _supports_buffered_weights():
    # Trace-time capability check (per review: no execute-then-fallback).
    try:
        return (hasattr(pl, "Buffered")
                and "pipeline_mode" in inspect.signature(pl.BlockSpec).parameters)
    except Exception:
        return False


_WEIGHT_SPEC_KWARGS = (
    {"pipeline_mode": pl.Buffered(1)} if _supports_buffered_weights() else {}
)


def _adapter_kernel(x_ref, w1t_ref, w2t_ref, o_ref, *, ratio, mxu_dtype):
    # x_ref: (rt, c_in) row tile; w1t_ref: (c_in, c_hidden); w2t_ref: (c_hidden, c_in).
    x = x_ref[...]
    xm = x if mxu_dtype is None else x.astype(mxu_dtype)

    # fc: Linear -> ReLU -> Linear -> ReLU  (MXU matmuls, f32 accumulation).
    h = jnp.dot(xm, w1t_ref[...], preferred_element_type=jnp.float32)
    h = jnp.maximum(h, 0.0)
    z = jnp.dot(h.astype(w2t_ref.dtype), w2t_ref[...],
                preferred_element_type=jnp.float32)
    z = jnp.maximum(z, 0.0)

    # Residual mix + L2 normalize in f32 (VPU elementwise + EUP rsqrt).
    xf = x.astype(jnp.float32)
    y = ratio * z + (1.0 - ratio) * xf
    sumsq = jnp.sum(y * y, axis=-1, keepdims=True)
    # The clamp only changes rows whose norm is exactly ~0 (PyTorch would give
    # inf/NaN) and guards garbage rows in the masked ragged last block.
    inv_norm = jax.lax.rsqrt(jnp.maximum(sumsq, 1e-30))
    o_ref[...] = (y * inv_norm).astype(o_ref.dtype)


def _residual_adapter_2d(x2d, w1t, w2t, *, ratio, row_tile, mxu_dtype, force_pallas):
    n_rows, c_in = x2d.shape
    c_hidden = w1t.shape[1]
    assert w1t.shape == (c_in, c_hidden) and w2t.shape == (c_hidden, c_in)

    # Tiny problems: pallas_call fixed overhead dominates -- let XLA fuse it.
    if not force_pallas and n_rows * c_in < (1 << 18):
        h = jnp.maximum(x2d @ w1t, 0.0)
        z = jnp.maximum(h @ w2t, 0.0)
        y = ratio * z + (1.0 - ratio) * x2d
        return y / jnp.linalg.norm(y, axis=-1, keepdims=True)

    x_isz = jnp.dtype(x2d.dtype).itemsize
    o_isz = x_isz
    w_isz = jnp.dtype(w1t.dtype).itemsize

    # Weights are resident (constant index_map).  Budget them double-buffered
    # so sizing stays safe even when pl.Buffered(1) is unavailable.
    w_bytes = 2 * (2 * c_in * c_hidden) * w_isz

    def _pipe_bytes(rt_):
        io = 2 * rt_ * c_in * (x_isz + o_isz)          # double-buffered x / out tiles
        interm = rt_ * (2 * c_hidden + 3 * c_in) * 4   # f32 h / z / xf / y live values
        return io + interm + w_bytes

    cap = _vmem_capacity_bytes()
    budget = int(cap * 0.70)

    # Largest row tile that fits the budget (never rounds n_rows up to rt).
    rt = max(8, _round_up(min(int(row_tile), _round_up(n_rows, 8)), 8))
    while rt > 8 and _pipe_bytes(rt) > budget:
        rt = max(8, (rt // 2) // 8 * 8)

    steps = _cdiv(n_rows, rt)
    if steps < 2 and n_rows >= 16:
        steps = 2                                      # keep both v7x TensorCores fed
    rt = max(8, _round_up(_cdiv(n_rows, steps), 8))    # rebalance; never grows past rt
    grid = (_cdiv(n_rows, rt),)

    needed = _pipe_bytes(rt)
    vmem_limit = int(min(cap * 85 // 100, max(needed * 2, 32 << 20)))

    compiler_params = pltpu.CompilerParams(
        dimension_semantics=("parallel",),
        vmem_limit_bytes=vmem_limit,
    )
    cost = pl.CostEstimate(
        flops=4 * n_rows * c_in * c_hidden + 6 * n_rows * c_in,
        transcendentals=n_rows,
        bytes_accessed=n_rows * c_in * (x_isz + o_isz) + 2 * c_in * c_hidden * w_isz,
    )

    kernel = functools.partial(_adapter_kernel, ratio=float(ratio), mxu_dtype=mxu_dtype)

    grid_spec = pltpu.PrefetchScalarGridSpec(
        num_scalar_prefetch=0,
        grid=grid,
        in_specs=[
            pl.BlockSpec((rt, c_in), lambda i: (i, 0)),
            pl.BlockSpec((c_in, c_hidden), lambda i: (0, 0), **_WEIGHT_SPEC_KWARGS),
            pl.BlockSpec((c_hidden, c_in), lambda i: (0, 0), **_WEIGHT_SPEC_KWARGS),
        ],
        out_specs=pl.BlockSpec((rt, c_in), lambda i: (i, 0)),
    )

    return pl.pallas_call(
        kernel,
        out_shape=jax.ShapeDtypeStruct((n_rows, c_in), x2d.dtype),
        grid_spec=grid_spec,
        compiler_params=compiler_params,
        cost_estimate=cost,
    )(x2d, w1t, w2t)


def residual_adapter(x, w1, w2, *, ratio=0.2, row_tile=1024, mxu_dtype=None,
                     force_pallas=False):
    """One-shot forward.  w1: (c_hidden, c_in), w2: (c_in, c_hidden) (PyTorch layout)."""
    w1t = jnp.asarray(w1).T
    w2t = jnp.asarray(w2).T
    if mxu_dtype is not None:
        w1t = w1t.astype(mxu_dtype)
        w2t = w2t.astype(mxu_dtype)
    shape = x.shape
    y2d = _residual_adapter_2d(x.reshape(-1, shape[-1]), w1t, w2t, ratio=ratio,
                               row_tile=row_tile, mxu_dtype=mxu_dtype,
                               force_pallas=force_pallas)
    return y2d.reshape(shape)


def make_residual_adapter(w1, w2, *, ratio=0.2, row_tile=1024, mxu_dtype=None,
                          force_pallas=False):
    """Factory: transposes / casts the (static) weights ONCE, returns x -> y."""
    w1t = jnp.asarray(w1).T            # (c_in, c_hidden), materialized eagerly
    w2t = jnp.asarray(w2).T            # (c_hidden, c_in)
    if mxu_dtype is not None:
        w1t = w1t.astype(mxu_dtype)
        w2t = w2t.astype(mxu_dtype)

    def apply(x):
        shape = x.shape
        y2d = _residual_adapter_2d(x.reshape(-1, shape[-1]), w1t, w2t, ratio=ratio,
                                   row_tile=row_tile, mxu_dtype=mxu_dtype,
                                   force_pallas=force_pallas)
        return y2d.reshape(shape)

    return apply


def _reference(x, w1, w2, ratio):
    # Pure-JAX reference mirroring the PyTorch forward.
    h = jnp.maximum(x @ w1.T, 0.0)
    z = jnp.maximum(h @ w2.T, 0.0)
    y = ratio * z + (1.0 - ratio) * x
    return y / jnp.linalg.norm(y, axis=-1, keepdims=True)


if __name__ == "__main__":
    key = jax.random.PRNGKey(0)
    k_x, k_w1, k_w2 = jax.random.split(key, 3)

    # Small shapes consistent with the module: batch=2, seq=8, c_in=32, reduction=4
    batch, seq, c_in, reduction = 2, 8, 32, 4
    c_hidden = c_in // reduction
    ratio = 0.2

    x = jax.random.normal(k_x, (batch, seq, c_in), dtype=jnp.float32)
    # Deterministic parameter init (nn.Linear-ish uniform scaling), no checkpoint.
    w1 = jax.random.uniform(k_w1, (c_hidden, c_in), jnp.float32,
                            minval=-1.0, maxval=1.0) / jnp.sqrt(c_in)
    w2 = jax.random.uniform(k_w2, (c_in, c_hidden), jnp.float32,
                            minval=-1.0, maxval=1.0) / jnp.sqrt(c_hidden)

    # Pallas path (force_pallas: demo shapes are below the tiny-problem cutoff).
    adapter = make_residual_adapter(w1, w2, ratio=ratio, force_pallas=True)
    y = jax.block_until_ready(adapter(x))
    y_ref = _reference(x, w1, w2, ratio)
    assert y.shape == x.shape
    assert jnp.allclose(y, y_ref, atol=1e-5, rtol=1e-5), "mismatch vs reference"

    # Ragged row count (21 rows) exercises the masked last block (no HBM pad/slice).
    x2 = jax.random.normal(k_w1, (3, 7, c_in), dtype=jnp.float32)
    y2 = jax.block_until_ready(
        residual_adapter(x2, w1, w2, ratio=ratio, force_pallas=True))
    assert jnp.allclose(y2, _reference(x2, w1, w2, ratio), atol=1e-5, rtol=1e-5), \
        "mismatch vs reference (ragged rows)"

    # Tiny-problem XLA fallback path (default behavior at this size).
    y3 = jax.block_until_ready(residual_adapter(x, w1, w2, ratio=ratio))
    assert jnp.allclose(y3, y_ref, atol=1e-5, rtol=1e-5), "mismatch (fallback path)"

    print("KERNEL_OK")
</pallas_src>

<mosaic_0001>
module attributes {stable_mosaic.version = 11 : i64} {
  func.func @_adapter_kernel(%arg0: i32, %arg1: memref<8x32xf32, #tpu.memory_space<vmem>>, %arg2: memref<32x8xf32, #tpu.memory_space<vmem>>, %arg3: memref<8x32xf32, #tpu.memory_space<vmem>>, %arg4: memref<8x32xf32, #tpu.memory_space<vmem>>) attributes {dimension_semantics = [#tpu.dimension_semantics<parallel>], iteration_bounds = array<i64: 2>, scalar_prefetch = 0 : i64, scratch_operands = 0 : i64, tpu.core_type = #tpu.core_type<tc>, window_params = [{transform_indices = @transform_0, window_bounds = array<i64: 8, 32>}, {pipeline_mode = #tpu.pipeline_mode<synchronous>, transform_indices = @transform_1, window_bounds = array<i64: 32, 8>}, {pipeline_mode = #tpu.pipeline_mode<synchronous>, transform_indices = @transform_2, window_bounds = array<i64: 8, 32>}, {transform_indices = @transform_3, window_bounds = array<i64: 8, 32>}]} {
    %c0 = arith.constant 0 : index
    %c0_0 = arith.constant 0 : index
    %0 = vector.load %arg1[%c0, %c0_0] : memref<8x32xf32, #tpu.memory_space<vmem>>, vector<8x32xf32>
    %c0_1 = arith.constant 0 : index
    %c0_2 = arith.constant 0 : index
    %1 = vector.load %arg2[%c0_1, %c0_2] : memref<32x8xf32, #tpu.memory_space<vmem>>, vector<32x8xf32>
    %cst = arith.constant dense<0.000000e+00> : vector<8x8xf32>
    %2 = tpu.matmul %0, %1, %cst {dimension_numbers = #tpu.dot_dimension_numbers<[1], [0], [0], [1], [0, 0, 1, 1], [], []>} : vector<8x32xf32>, vector<32x8xf32>, vector<8x8xf32> -> vector<8x8xf32>
    %cst_3 = arith.constant 0.000000e+00 : f32
    %3 = vector.broadcast %cst_3 : f32 to vector<8x8xf32>
    %4 = arith.maximumf %2, %3 : vector<8x8xf32>
    %c0_4 = arith.constant 0 : index
    %c0_5 = arith.constant 0 : index
    %5 = vector.load %arg3[%c0_4, %c0_5] : memref<8x32xf32, #tpu.memory_space<vmem>>, vector<8x32xf32>
    %cst_6 = arith.constant dense<0.000000e+00> : vector<8x32xf32>
    %6 = tpu.matmul %4, %5, %cst_6 {dimension_numbers = #tpu.dot_dimension_numbers<[1], [0], [0], [1], [0, 0, 1, 1], [], []>} : vector<8x8xf32>, vector<8x32xf32>, vector<8x32xf32> -> vector<8x32xf32>
    %cst_7 = arith.constant 0.000000e+00 : f32
    %7 = vector.broadcast %cst_7 : f32 to vector<8x32xf32>
    %8 = arith.maximumf %6, %7 : vector<8x32xf32>
    %cst_8 = arith.constant 2.000000e-01 : f32
    %9 = vector.broadcast %cst_8 : f32 to vector<8x32xf32>
    %10 = arith.mulf %9, %8 : vector<8x32xf32>
    %cst_9 = arith.constant 8.000000e-01 : f32
    %11 = vector.broadcast %cst_9 : f32 to vector<8x32xf32>
    %12 = arith.mulf %11, %0 : vector<8x32xf32>
    %13 = arith.addf %10, %12 : vector<8x32xf32>
    %14 = arith.mulf %13, %13 : vector<8x32xf32>
    %cst_10 = arith.constant dense<0.000000e+00> : vector<8xf32>
    %15 = vector.multi_reduction <add>, %14, %cst_10 [1] : vector<8x32xf32> to vector<8xf32>
    %16 = vector.shape_cast %15 : vector<8xf32> to vector<8x1xf32>
    %cst_11 = arith.constant 1.000000e-30 : f32
    %17 = vector.broadcast %cst_11 : f32 to vector<8x1xf32>
    %18 = arith.maximumf %16, %17 : vector<8x1xf32>
    %19 = math.rsqrt %18 : vector<8x1xf32>
    %20 = vector.broadcast %19 : vector<8x1xf32> to vector<8x32xf32>
    %21 = arith.mulf %13, %20 : vector<8x32xf32>
    %c0_12 = arith.constant 0 : index
    %c0_13 = arith.constant 0 : index
    %22 = vector.load %arg4[%c0_12, %c0_13] : memref<8x32xf32, #tpu.memory_space<vmem>>, vector<8x32xf32>
    tpu.vector_store %arg4[%c0_12, %c0_13], %21 {strides = array<i32>} : memref<8x32xf32, #tpu.memory_space<vmem>>, vector<8x32xf32>,
    return
  }
  func.func @transform_0(%arg0: i32) -> (i32, i32) {
    %c0_i32 = arith.constant 0 : i32
    %c0_i32_0 = arith.constant 0 : i32
    return %arg0, %c0_i32 : i32, i32
  }
  func.func @transform_1(%arg0: i32) -> (i32, i32) {
    %c0_i32 = arith.constant 0 : i32
    %c0_i32_0 = arith.constant 0 : i32
    %c0_i32_1 = arith.constant 0 : i32
    return %c0_i32, %c0_i32_0 : i32, i32
  }
  func.func @transform_2(%arg0: i32) -> (i32, i32) {
    %c0_i32 = arith.constant 0 : i32
    %c0_i32_0 = arith.constant 0 : i32
    %c0_i32_1 = arith.constant 0 : i32
    return %c0_i32, %c0_i32_0 : i32, i32
  }
  func.func @transform_3(%arg0: i32) -> (i32, i32) {
    %c0_i32 = arith.constant 0 : i32
    %c0_i32_0 = arith.constant 0 : i32
    return %arg0, %c0_i32 : i32, i32
  }
}

</mosaic_0001>

<llo_original>
// kernel: tpu_custom_call.1
$region0: #{tpu_custom_call.1}
  #allocation0 [shape = 'u32[]', space=smem, size = 0x4, offset = 0x4, fixed_abs, tag = 'smem constant byte address 0x4 - core index']
  #allocation1 [shape = 'u32[144,128]{1,0:T(1,128)}', space=vmem, size = 0x12000, scoped, tag = 'internal scratch']
  %s0 = inlined_call_operand.vmem [shape: f32[16,32], index: 0, kind: input, shape index: {}]
  %s1 = inlined_call_operand.vmem [shape: f32[32,8], index: 1, kind: input, shape index: {}]
  %s2 = inlined_call_operand.vmem [shape: f32[8,32], index: 2, kind: input, shape index: {}]
  %s3 = inlined_call_operand.hbm [shape: f32[16,32], index: 3, kind: output, shape index: {}]
  %s4 = sld [smem:[#allocation0]]
  $region45: #{tpu_custom_call.1} parent=0
    _
  %s6 = ssub.s32 1, %s4
  %s7 = scalar_select 0, %s6, %s4
  $region1: #{tpu_custom_call.1} parent=0
    #allocation2 [shape = 'u8[8192]{0}', space=vmem, size = 0x2000, scoped, tag = 'output window, operand 0']
    #allocation3 [shape = 's32[2]{0}', space=sflag, size = 0x8, scoped, tag = 'scoped memory for tpu_custom_call.1']
    %8 = vsyncpa [#allocation3], 0
    %s9 = scalar_lea.sflag [#allocation3], 1
    %10 = vsyncpa %s9, 0
    loop: start=0, step=1, limit=4
    $region2: #{tpu_custom_call.1} parent=1 // loop_pre_header
      _
    $region3: #{tpu_custom_call.1} parent=1 // loop_header
      %s12 = sphi 0, %s16
      %p13 = scmp.ge.s32.totalorder %s12, 4
      %s22 = sphi 0, %s24
      %s25 = sphi 0, %s22
      %s26 = sphi 0, %s25
      %s42 = sphi 0, %s26
      %s46 = sphi 0, %s46
      %s48 = sphi 0, %s46
      %s49 = sphi 0, %s48
      %s63 = sphi 0, %s49
      %s67 = sphi 0, %s67
      %s69 = sphi 0, %s67
      %s70 = sphi 0, %s69
      %s84 = sphi 0, %s70
      %s90 = sphi 0, %s92
      %s93 = sphi 0, %s90
      %s94 = sphi 0, %s93
      %s110 = sphi 0, %s94
    $region4: #{tpu_custom_call.1} parent=1 // loop_header_branch
      %15 = sbr.rel (%p13) target = $region8
    $region5: #{tpu_custom_call.1} parent=1 // loop_body
      %s17 = ssub.s32 %s12, 1
      %s18 = ssub.s32 %s12, 2
      %s19 = sadd.s32 %s12, 1
      %s20 = ssub.s32 %s12, %s19
      %p21 = scmp.eq.s32.totalorder %s20, 0
      %s23 = sadd.s32 %s22, 1
      %s24 = scalar_select %p21, %s22, %s23
      %p27 = pneg %p21
      %p28 = scmp.eq.s32.totalorder %s12, 1
      %p29 = por %p27, %p28
      %p30 = scmp.ne.s32.totalorder %s22, %s25
      %p31 = scmp.eq.s32.totalorder %s12, 0
      %p32 = por %p30, %p31
      %p33 = scmp.ne.s32.totalorder %s22, %s25
      %p34 = scmp.eq.s32.totalorder %s17, 1
      %p35 = por %p33, %p34
      %p36 = scmp.ne.s32.totalorder %s25, %s26
      %p37 = scmp.eq.s32.totalorder %s17, 0
      %p38 = por %p36, %p37
      %p39 = scmp.ne.s32.totalorder %s25, %s26
      %p40 = scmp.eq.s32.totalorder %s18, 1
      %p41 = por %p39, %p40
      %p43 = scmp.ne.s32.totalorder %s26, %s42
      %p44 = scmp.eq.s32.totalorder %s18, 0
      %p45 = por %p43, %p44
      %s47 = sadd.s32 %s46, 1
      %p50 = scmp.eq.s32.totalorder %s12, 1
      %p51 = scmp.ne.s32.totalorder %s46, %s48
      %p52 = scmp.eq.s32.totalorder %s12, 0
      %p53 = por %p51, %p52
      %p54 = scmp.ne.s32.totalorder %s46, %s48
      %p55 = scmp.eq.s32.totalorder %s17, 1
      %p56 = por %p54, %p55
      %p57 = scmp.ne.s32.totalorder %s48, %s49
      %p58 = scmp.eq.s32.totalorder %s17, 0
      %p59 = por %p57, %p58
      %p60 = scmp.ne.s32.totalorder %s48, %s49
      %p61 = scmp.eq.s32.totalorder %s18, 1
      %p62 = por %p60, %p61
      %p64 = scmp.ne.s32.totalorder %s49, %s63
      %p65 = scmp.eq.s32.totalorder %s18, 0
      %p66 = por %p64, %p65
      %s68 = sadd.s32 %s67, 1
      %p71 = scmp.eq.s32.totalorder %s12, 1
      %p72 = scmp.ne.s32.totalorder %s67, %s69
      %p73 = scmp.eq.s32.totalorder %s12, 0
      %p74 = por %p72, %p73
      %p75 = scmp.ne.s32.totalorder %s67, %s69
      %p76 = scmp.eq.s32.totalorder %s17, 1
      %p77 = por %p75, %p76
      %p78 = scmp.ne.s32.totalorder %s69, %s70
      %p79 = scmp.eq.s32.totalorder %s17, 0
      %p80 = por %p78, %p79
      %p81 = scmp.ne.s32.totalorder %s69, %s70
      %p82 = scmp.eq.s32.totalorder %s18, 1
      %p83 = por %p81, %p82
      %p85 = scmp.ne.s32.totalorder %s70, %s84
      %p86 = scmp.eq.s32.totalorder %s18, 0
      %p87 = por %p85, %p86
      %s88 = ssub.s32 %s12, %s19
      %p89 = scmp.eq.s32.totalorder %s88, 0
      %s91 = sadd.s32 %s90, 1
      %s92 = scalar_select %p89, %s90, %s91
      %p95 = pneg %p89
      %p96 = scmp.eq.s32.totalorder %s12, 1
      %p97 = por %p95, %p96
      %p98 = scmp.ne.s32.totalorder %s90, %s93
      %p99 = scmp.eq.s32.totalorder %s12, 0
      %p100 = por %p98, %p99
      %p101 = scmp.ne.s32.totalorder %s90, %s93
      %p102 = scmp.eq.s32.totalorder %s17, 1
      %p103 = por %p101, %p102
      %p104 = scmp.ne.s32.totalorder %s93, %s94
      %p105 = scmp.eq.s32.totalorder %s17, 0
      %p106 = por %p104, %p105
      %p107 = scmp.ne.s32.totalorder %s93, %s94
      %p108 = scmp.eq.s32.totalorder %s18, 1
      %p109 = por %p107, %p108
      %p111 = scmp.ne.s32.totalorder %s94, %s110
      %p112 = scmp.eq.s32.totalorder %s18, 0
      %p113 = por %p111, %p112
      %p114 = scmp.le.s32.totalorder 1, %s12
      %p115 = scmp.lt.s32.totalorder %s12, 3
      %p116 = pnand %p114, %p115
      %p117 = pneg %p116
      // Predicated region
      $region9: #{tpu_custom_call.1} parent=5 // pred_check
        _
      $region10: #{tpu_custom_call.1} parent=5 // pred_check_branch
        %119 = sbr.rel (%p116) target = $region12
      $region11: #{tpu_custom_call.1} parent=5 // pred_region
        %s120 = ssub.s32 %s12, 1
        // Predicated region
        $region13: #{tpu_custom_call.1} parent=11 // pred_check
          %p121 = pneg %p59
        $region14: #{tpu_custom_call.1} parent=11 // pred_check_branch
          %123 = sbr.rel (%p121) target = $region16
        $region15: #{tpu_custom_call.1} parent=11 // pred_region
          _
        $region16: #{tpu_custom_call.1} parent=11 // pred_fallthru
          _
        // Predicated region
        $region17: #{tpu_custom_call.1} parent=11 // pred_check
          %p124 = pneg %p80
        $region18: #{tpu_custom_call.1} parent=11 // pred_check_branch
          %126 = sbr.rel (%p124) target = $region20
        $region19: #{tpu_custom_call.1} parent=11 // pred_region
          _
        $region20: #{tpu_custom_call.1} parent=11 // pred_fallthru
          _
      $region12: #{tpu_custom_call.1} parent=5 // pred_fallthru
        _
      %p127 = scmp.lt.s32.totalorder %s12, 2
      // Predicated region
      $region21: #{tpu_custom_call.1} parent=5 // pred_check
        %p128 = pneg %p127
      $region22: #{tpu_custom_call.1} parent=5 // pred_check_branch
        %130 = sbr.rel (%p128) target = $region24
      $region23: #{tpu_custom_call.1} parent=5 // pred_region
        // Predicated region
        $region25: #{tpu_custom_call.1} parent=23 // pred_check
          %p131 = pneg %p32
        $region26: #{tpu_custom_call.1} parent=23 // pred_check_branch
          %133 = sbr.rel (%p131) target = $region28
        $region27: #{tpu_custom_call.1} parent=23 // pred_region
          %p134 = scmp.lt.s32.totalorder %s12, 1
          %s135 = scalar_select %p134, %s12, 1
          %s136 = smul.addr %s135, 8
          %s137 = scalar_lea.vmem %s0, %s136
        $region28: #{tpu_custom_call.1} parent=23 // pred_fallthru
          _
      $region24: #{tpu_custom_call.1} parent=5 // pred_fallthru
        _
      %p138 = scmp.le.s32.totalorder 1, %s12
      %p139 = scmp.lt.s32.totalorder %s12, 3
      %p140 = pnand %p138, %p139
      %p141 = pneg %p140
      // Predicated region
      $region29: #{tpu_custom_call.1} parent=5 // pred_check
        _
      $region30: #{tpu_custom_call.1} parent=5 // pred_check_branch
        %143 = sbr.rel (%p140) target = $region32
      $region31: #{tpu_custom_call.1} parent=5 // pred_region
        %s144 = ssub.s32 %s12, 1
        %p145 = scmp.lt.s32.totalorder %s17, 1
        %s146 = scalar_select %p145, %s17, 1
        %s147 = smul.addr %s146, 8
        %s148 = scalar_lea.vmem %s0, %s147
        %p149 = pneg %p38
        %p150 = pneg %p35
        %p151 = pneg %p59
        %p152 = pneg %p56
        %p153 = pneg %p80
        %p154 = pneg %p77
        %p155 = pneg %p106
        %p156 = pneg %p103
        %s157 = sand.u32 %s93, 1
        %s158 = scalar_lea.sflag [#allocation3], %s157
        %s159 = sand.u32 %s93, 1
        %s160 = smul.addr %s159, 8
        %s161 = scalar_lea.vmem [#allocation2], %s160
        %p162 = scmp.lt.s32.totalorder %s17, 1
        %s163 = scalar_select %p162, %s17, 1
        %s164 = smul.addr %s163, 8
        %s165 = scalar_lea.vmem %s0, %s164
        %v166 = vld [vmem:[%s165] sm:$0xff]
        %v167 = vld [vmem:[%s1] sm:$0xff]
        %v168 = vld [vmem:[%s1 + $0x8] sm:$0xff]
        %v169 = vld [vmem:[%s1 + $0x10] sm:$0xff]
        %v170 = vld [vmem:[%s1 + $0x18] sm:$0xff]
        %vm171 = vcmask 261120
        %v173 = vsel %vm171, %v166, 0
        %175 = vmatprep.subr.mxu0 0.0
        %176 = vmatpush1.msra.mxu0 %v167
        %177 = vmatprep.subr.mxu0 0.0
        %178 = vmatpush1.msra.mxu0 %v168
        %179 = vmatprep.subr.mxu0 0.0
        %180 = vmatpush1.msra.mxu0 %v169
        %181 = vmatprep.subr.mxu0 0.0
        %182 = vmatpush1.msra.mxu0 %v170
        %183 = vmatprep.subr.mxu0 0.0
        %184 = vmatpush1.msra.mxu0 0.0
        %185 = vmatprep.subr.mxu0 0.0
        %186 = vmatpush1.msra.mxu0 0.0
        %187 = vmatprep.subr.mxu0 0.0
        %188 = vmatpush1.msra.mxu0 0.0
        %189 = vmatprep.subr.mxu0 0.0
        %190 = vmatpush1.msra.mxu0 0.0
        %191 = vmatprep.subr.mxu0 0.0
        %192 = vmatpush1.msra.mxu0 0.0
        %193 = vmatprep.subr.mxu0 0.0
        %194 = vmatpush1.msra.mxu0 0.0
        %195 = vmatprep.subr.mxu0 0.0
        %196 = vmatpush1.msra.mxu0 0.0
        %197 = vmatprep.subr.mxu0 0.0
        %198 = vmatpush1.msra.mxu0 0.0
        %199 = vmatprep.subr.mxu0 0.0
        %200 = vmatpush1.msra.mxu0 0.0
        %201 = vmatprep.subr.mxu0 0.0
        %202 = vmatpush1.msra.mxu0 0.0
        %203 = vmatprep.subr.mxu0 0.0
        %204 = vmatpush1.msra.mxu0 0.0
        %205 = vmatprep.subr.mxu0 0.0
        %206 = vmatpush1.msra.mxu0 0.0
        %207 = vmatprep.subr.mxu0 0.0
        %208 = vmatpush1.msra.mxu0 0.0
        %209 = vmatprep.subr.mxu0 0.0
        %210 = vmatpush1.msra.mxu0 0.0
        %211 = vmatprep.subr.mxu0 0.0
        %212 = vmatpush1.msra.mxu0 0.0
        %213 = vmatprep.subr.mxu0 0.0
        %214 = vmatpush1.msra.mxu0 0.0
        %215 = vmatprep.subr.mxu0 0.0
        %216 = vmatpush1.msra.mxu0 0.0
        %217 = vmatprep.subr.mxu0 0.0
        %218 = vmatpush1.msra.mxu0 0.0
        %219 = vmatprep.subr.mxu0 0.0
        %220 = vmatpush1.msra.mxu0 0.0
        %221 = vmatprep.subr.mxu0 0.0
        %222 = vmatpush1.msra.mxu0 0.0
        %223 = vmatprep.subr.mxu0 0.0
        %224 = vmatpush1.msra.mxu0 0.0
        %225 = vmatprep.subr.mxu0 0.0
        %226 = vmatpush1.msra.mxu0 0.0
        %227 = vmatprep.subr.mxu0 0.0
        %228 = vmatpush1.msra.mxu0 0.0
        %229 = vmatprep.subr.mxu0 0.0
        %230 = vmatpush1.msra.mxu0 0.0
        %231 = vmatprep.subr.mxu0 0.0
        %232 = vmatpush1.msra.mxu0 0.0
        %233 = vmatprep.subr.mxu0 0.0
        %234 = vmatpush1.msra.mxu0 0.0
        %235 = vmatprep.subr.mxu0 0.0
        %236 = vmatpush1.msra.mxu0 0.0
        %237 = vmatprep.subr.mxu0 0.0
        %238 = vmatpush1.msra.mxu0 0.0
        %239 = vmatprep.mubr.f32.mxu0 0.0
        %240 = vmatmul.mubr.f32.gmra.mrb[0].mxu0 %v173
        %v241 = vpop.f32.mrb[0].mxu0
        %v242 = vadd.f32 0.0, %v241
        %v243 = vpop.f32.mrb[0].mxu0
        %244 = vdwg.mxu0
        %v245 = vmax.f32 %v242, 0.0
        %v246 = vld [vmem:[%s2] sm:$0xff]
        %vm247 = vcmask 64512
        %v249 = vsel %vm247, %v245, 0
        %251 = vmatprep.subr.mxu0 0.0
        %252 = vmatpush1.msra.mxu0 %v246
        %253 = vmatprep.subr.mxu0 0.0
        %254 = vmatpush1.msra.mxu0 0.0
        %255 = vmatprep.subr.mxu0 0.0
        %256 = vmatpush1.msra.mxu0 0.0
        %257 = vmatprep.subr.mxu0 0.0
        %258 = vmatpush1.msra.mxu0 0.0
        %259 = vmatprep.subr.mxu0 0.0
        %260 = vmatpush1.msra.mxu0 0.0
        %261 = vmatprep.subr.mxu0 0.0
        %262 = vmatpush1.msra.mxu0 0.0
        %263 = vmatprep.subr.mxu0 0.0
        %264 = vmatpush1.msra.mxu0 0.0
        %265 = vmatprep.subr.mxu0 0.0
        %266 = vmatpush1.msra.mxu0 0.0
        %267 = vmatprep.subr.mxu0 0.0
        %268 = vmatpush1.msra.mxu0 0.0
        %269 = vmatprep.subr.mxu0 0.0
        %270 = vmatpush1.msra.mxu0 0.0
        %271 = vmatprep.subr.mxu0 0.0
        %272 = vmatpush1.msra.mxu0 0.0
        %273 = vmatprep.subr.mxu0 0.0
        %274 = vmatpush1.msra.mxu0 0.0
        %275 = vmatprep.subr.mxu0 0.0
        %276 = vmatpush1.msra.mxu0 0.0
        %277 = vmatprep.subr.mxu0 0.0
        %278 = vmatpush1.msra.mxu0 0.0
        %279 = vmatprep.subr.mxu0 0.0
        %280 = vmatpush1.msra.mxu0 0.0
        %281 = vmatprep.subr.mxu0 0.0
        %282 = vmatpush1.msra.mxu0 0.0
        %283 = vmatprep.subr.mxu0 0.0
        %284 = vmatpush1.msra.mxu0 0.0
        %285 = vmatprep.subr.mxu0 0.0
        %286 = vmatpush1.msra.mxu0 0.0
        %287 = vmatprep.subr.mxu0 0.0
        %288 = vmatpush1.msra.mxu0 0.0
        %289 = vmatprep.subr.mxu0 0.0
        %290 = vmatpush1.msra.mxu0 0.0
        %291 = vmatprep.subr.mxu0 0.0
        %292 = vmatpush1.msra.mxu0 0.0
        %293 = vmatprep.subr.mxu0 0.0
        %294 = vmatpush1.msra.mxu0 0.0
        %295 = vmatprep.subr.mxu0 0.0
        %296 = vmatpush1.msra.mxu0 0.0
        %297 = vmatprep.subr.mxu0 0.0
        %298 = vmatpush1.msra.mxu0 0.0
        %299 = vmatprep.subr.mxu0 0.0
        %300 = vmatpush1.msra.mxu0 0.0
        %301 = vmatprep.subr.mxu0 0.0
        %302 = vmatpush1.msra.mxu0 0.0
        %303 = vmatprep.subr.mxu0 0.0
        %304 = vmatpush1.msra.mxu0 0.0
        %305 = vmatprep.subr.mxu0 0.0
        %306 = vmatpush1.msra.mxu0 0.0
        %307 = vmatprep.subr.mxu0 0.0
        %308 = vmatpush1.msra.mxu0 0.0
        %309 = vmatprep.subr.mxu0 0.0
        %310 = vmatpush1.msra.mxu0 0.0
        %311 = vmatprep.subr.mxu0 0.0
        %312 = vmatpush1.msra.mxu0 0.0
        %313 = vmatprep.subr.mxu0 0.0
        %314 = vmatpush1.msra.mxu0 0.0
        %315 = vmatprep.mubr.f32.mxu0 0.0
        %316 = vmatmul.mubr.f32.gmra.mrb[0].mxu0 %v249
        %v317 = vpop.f32.mrb[0].mxu0
        %v318 = vadd.f32 0.0, %v317
        %v319 = vpop.f32.mrb[0].mxu0
        %320 = vdwg.mxu0
        %v321 = vmax.f32 %v318, 0.0
        %v322 = vmul.f32 %v321, 0.2
        %v323 = vmul.f32 %v166, 0.8
        %v324 = vadd.f32 %v322, %v323
        %v325 = vmul.f32 %v324, %v324
        %v326 = vsel %vm171, %v325, 0.0
        %327 = vadd.xlane.f32.xlu0 %v326
        %v328 = vpop.xlane.xlu0 %327
        %v329 = vmax.f32 %v328, 1e-30
        %v330 = vrsqrt.pop %v329
        %v331 = vmul.f32 %v324, %v330
        %332 = vst.msk [vmem:[%s161] sm:$0xff] %vm171, %v331
        %s333 = sand.u32 %s93, 1
        %s334 = scalar_lea.sflag [#allocation3], %s333
        %s335 = sand.u32 %s93, 1
        %s336 = smul.addr %s335, 8
        %s337 = scalar_lea.vmem [#allocation2], %s336
        // Predicated region
        $region33: #{tpu_custom_call.1} parent=31 // pred_check
          %p338 = pneg %p103
        $region34: #{tpu_custom_call.1} parent=31 // pred_check_branch
          %340 = sbr.rel (%p338) target = $region36
        $region35: #{tpu_custom_call.1} parent=31 // pred_region
          %s342 = ssub.s32 128, 128
          %343 = vsyncadd %s334, %s342
          %s344 = smul.addr %s17, 128
          %s345 = scalar_lea.hbm %s3, %s344
          %s347 = sshll.u32 %s337, 4
          %s348 = int_to_ptr.vmem [resolvable:$true] %s347
          %350 = dma.vmem_to_hbm [thread:$0]  %s348, 128, %s345, %s334
        $region36: #{tpu_custom_call.1} parent=31 // pred_fallthru
          _
      $region32: #{tpu_custom_call.1} parent=5 // pred_fallthru
        _
      %p351 = scmp.le.s32.totalorder 2, %s12
      // Predicated region
      $region37: #{tpu_custom_call.1} parent=5 // pred_check
        %p352 = pneg %p351
      $region38: #{tpu_custom_call.1} parent=5 // pred_check_branch
        %354 = sbr.rel (%p352) target = $region40
      $region39: #{tpu_custom_call.1} parent=5 // pred_region
        %s355 = ssub.s32 %s12, 2
        // Predicated region
        $region41: #{tpu_custom_call.1} parent=39 // pred_check
          %p356 = pneg %p109
        $region42: #{tpu_custom_call.1} parent=39 // pred_check_branch
          %358 = sbr.rel (%p356) target = $region44
        $region43: #{tpu_custom_call.1} parent=39 // pred_region
          %s359 = sand.u32 %s94, 1
          %s360 = scalar_lea.sflag [#allocation3], %s359
          %s361 = sand.u32 %s94, 1
          %s362 = smul.addr %s361, 8
          %s363 = scalar_lea.vmem [#allocation2], %s362
          %364 = dma.done %s360, 128
        $region44: #{tpu_custom_call.1} parent=39 // pred_fallthru
          _
      $region40: #{tpu_custom_call.1} parent=5 // pred_fallthru
        _
    $region6: #{tpu_custom_call.1} parent=1 // loop_footer
      %s16 = sadd.s32 1, %s12
    $region7: #{tpu_custom_call.1} parent=1 // loop_footer_branch
      %11 = sbr.rel target = $region3
    $region8: #{tpu_custom_call.1} parent=1 // loop_exit
      _
    %365 = vsyncpa [#allocation3], 1
    %s366 = scalar_lea.sflag [#allocation3], 1
    %367 = vsyncpa %s366, 1

</llo_original>
